<compile_context>
chip_gen: v6e
topology: v6e:2x2x1
jax: 0.10.0
libtpu: 0.0.40
codegen_flags: <defaults>
</compile_context>

<pallas_src>
import jax
import jax.numpy as jnp
from jax.experimental import pallas as pl
from jax.experimental.pallas import tpu as pltpu

_LANES_CANDIDATES = (1024, 512, 256, 128)   # lane-dense widths (multiples of 128)
_TARGET_BLOCK_BYTES = 2 * 1024 * 1024       # ~2 MiB per block, dtype-independent
_SMALL_N = 64 * 1024                        # below this, plain jnp is faster


def _laplace_density_kernel(scal_ref, sdf_ref, out_ref):
    # scal_ref: SMEM f32 array of shape (2,) = [alpha, -alpha]
    alpha = scal_ref[0]
    neg_alpha = scal_ref[1]
    s = sdf_ref[...].astype(jnp.float32)
    # alpha * (0.5 + 0.5*sign(s)*expm1(-|s|/beta))
    #   == alpha * (0.5*exp(-|s|*alpha))          for s >= 0
    #   == alpha * (1 - 0.5*exp(-|s|*alpha))      for s <  0
    t = 0.5 * jnp.exp(jnp.abs(s) * neg_alpha)
    dens = alpha * jnp.where(s >= 0.0, t, 1.0 - t)
    out_ref[...] = dens.astype(out_ref.dtype)


def laplace_density(sdf: jax.Array, beta_param: jax.Array, beta_min_param: jax.Array,
                    beta: jax.Array | None = None) -> jax.Array:
    """Pallas implementation of LaplaceDensity.forward.

    sdf:            any shape (f32 or bf16)
    beta_param:     shape (1,)  (learnable `beta` parameter)
    beta_min_param: shape (1,)  (fixed `beta_min` parameter)
    beta:           optional scalar override (same as the PyTorch `beta` kwarg)
    """
    if beta is None:
        beta = jnp.abs(beta_param) + beta_min_param          # get_beta()
    beta = beta.reshape(-1)[0].astype(jnp.float32)
    alpha = 1.0 / beta

    orig_shape = sdf.shape
    dtype = sdf.dtype
    n = sdf.size

    # ---- Small-input fast path: latency-bound regime, skip pallas entirely.
    if n < _SMALL_N:
        s = sdf.astype(jnp.float32)
        out = alpha * (0.5 + 0.5 * jnp.sign(s) * jnp.expm1(-jnp.abs(s) * alpha))
        return out.astype(dtype)

    # Scalars computed once in the wrapper; kernel body is a pure VPU/EUP stream.
    scalars = jnp.stack([alpha, -alpha]).astype(jnp.float32)

    flat = sdf.reshape(-1)
    # Pick the widest lane count that divides n so the 2-D reshape is free
    # (no pad / output-slice HBM round trips).
    lanes = next((c for c in _LANES_CANDIDATES if n % c == 0), None)
    pad = 0
    if lanes is None:
        # TODO(synk): mask the ragged tail in-kernel (scalar-prefetch n + masked
        # store) instead of this pad/slice pair, each of which costs a full
        # extra HBM read+write for unaligned sizes.
        lanes = _LANES_CANDIDATES[0]
        pad = (-n) % lanes
        flat = jnp.pad(flat, (0, pad))
    rows = (n + pad) // lanes

    itemsize = jnp.dtype(dtype).itemsize
    sub = max(8, 32 // itemsize)                 # sublane multiple: f32->8, bf16->16
    block_rows = _TARGET_BLOCK_BYTES // (lanes * itemsize)
    block_rows = max(sub, (block_rows // sub) * sub)
    if rows <= block_rows:
        block_rows = rows                        # full-extent block is always legal
    # Last block may be ragged (rows need not divide evenly); Pallas masks the
    # out-of-bounds write-back, so no padding to a block multiple is required.
    grid = (pl.cdiv(rows, block_rows),)

    x2d = flat.reshape(rows, lanes)
    out2d = pl.pallas_call(
        _laplace_density_kernel,
        out_shape=jax.ShapeDtypeStruct((rows, lanes), dtype),
        grid=grid,
        in_specs=[
            pl.BlockSpec(memory_space=pltpu.MemorySpace.SMEM),        # [alpha, -alpha]
            pl.BlockSpec((block_rows, lanes), lambda i: (i, 0)),      # sdf tile
        ],
        out_specs=pl.BlockSpec((block_rows, lanes), lambda i: (i, 0)),
        compiler_params=pltpu.CompilerParams(
            dimension_semantics=("parallel",),
            # <= 2 MiB per tile, double-buffered in+out => <= 8 MiB live buffers.
            vmem_limit_bytes=32 * 1024 * 1024,
        ),
    )(scalars, x2d)

    out_flat = out2d.reshape(-1)
    if pad:
        out_flat = out_flat[:n]
    return out_flat.reshape(orig_shape)


def _reference(sdf, beta_param, beta_min_param, beta=None):
    if beta is None:
        beta = jnp.abs(beta_param) + beta_min_param
    beta = beta.reshape(-1)[0].astype(jnp.float32)
    alpha = 1.0 / beta
    s = sdf.astype(jnp.float32)
    out = alpha * (0.5 + 0.5 * jnp.sign(s) * jnp.expm1(-jnp.abs(s) / beta))
    return out.astype(sdf.dtype)


if __name__ == "__main__":
    key = jax.random.PRNGKey(0)
    k1, k2, k3 = jax.random.split(key, 3)

    # Deterministic "parameters" mirroring __init__(init_val=0.1, beta_min=1e-4)
    init_val = 0.1
    beta_min = 1e-4
    beta_param = init_val * jnp.ones((1,), dtype=jnp.float32)
    beta_min_param = beta_min * jnp.ones((1,), dtype=jnp.float32)

    # 1) Typical small module shape (num_rays, num_samples, 1) -> jnp fast path.
    sdf_small = jax.random.normal(k1, (2, 128, 1), dtype=jnp.float32) * 0.5
    out_small = jax.block_until_ready(laplace_density(sdf_small, beta_param, beta_min_param))
    ref_small = _reference(sdf_small, beta_param, beta_min_param)
    assert out_small.shape == sdf_small.shape and out_small.dtype == sdf_small.dtype
    assert jnp.allclose(out_small, ref_small, rtol=1e-5, atol=1e-5), "small f32 mismatch"

    # Optional explicit beta override (the PyTorch `beta` kwarg).
    beta_override = jnp.array([0.05], dtype=jnp.float32)
    out_ovr = jax.block_until_ready(
        laplace_density(sdf_small, beta_param, beta_min_param, beta=beta_override))
    ref_ovr = _reference(sdf_small, beta_param, beta_min_param, beta=beta_override)
    assert jnp.allclose(out_ovr, ref_ovr, rtol=1e-5, atol=1e-5), "beta-override mismatch"

    # 2) Lane-aligned shape -> Pallas path with zero pad/slice (n = 65536).
    sdf_f32 = jax.random.normal(k2, (128, 512, 1), dtype=jnp.float32) * 0.5
    out_f32 = jax.block_until_ready(laplace_density(sdf_f32, beta_param, beta_min_param))
    ref_f32 = _reference(sdf_f32, beta_param, beta_min_param)
    assert out_f32.shape == sdf_f32.shape and out_f32.dtype == sdf_f32.dtype
    assert jnp.allclose(out_f32, ref_f32, rtol=1e-5, atol=1e-5), "f32 mismatch vs reference"

    # 3) Unaligned shape -> Pallas fallback (pad + slice) path.
    sdf_odd = jax.random.normal(k3, (131, 513, 1), dtype=jnp.float32) * 0.5
    out_odd = jax.block_until_ready(laplace_density(sdf_odd, beta_param, beta_min_param))
    ref_odd = _reference(sdf_odd, beta_param, beta_min_param)
    assert out_odd.shape == sdf_odd.shape
    assert jnp.allclose(out_odd, ref_odd, rtol=1e-5, atol=1e-5), "unaligned f32 mismatch"

    # 4) bf16 path: DMA'd as bf16, computed in f32 in-register, written back as bf16.
    sdf_bf16 = sdf_f32.astype(jnp.bfloat16)
    out_bf16 = jax.block_until_ready(laplace_density(sdf_bf16, beta_param, beta_min_param))
    ref_bf16 = _reference(sdf_bf16, beta_param, beta_min_param)
    assert out_bf16.shape == sdf_bf16.shape and out_bf16.dtype == jnp.bfloat16
    assert jnp.allclose(out_bf16.astype(jnp.float32), ref_bf16.astype(jnp.float32),
                        rtol=1e-2, atol=5e-2), "bf16 mismatch vs reference"

    print("KERNEL_OK")
</pallas_src>

<mosaic_0001>
module attributes {stable_mosaic.version = 11 : i64} {
  func.func @_laplace_density_kernel(%arg0: i32, %arg1: memref<2xf32, #tpu.memory_space<smem>>, %arg2: memref<64x1024xf32, #tpu.memory_space<vmem>>, %arg3: memref<64x1024xf32, #tpu.memory_space<vmem>>) attributes {dimension_semantics = [#tpu.dimension_semantics<parallel>], iteration_bounds = array<i64: 1>, scalar_prefetch = 0 : i64, scratch_operands = 0 : i64, tpu.core_type = #tpu.core_type<tc>, window_params = [{transform_indices = @transform_0, window_bounds = array<i64: 2>}, {transform_indices = @transform_1, window_bounds = array<i64: 64, 1024>}, {transform_indices = @transform_2, window_bounds = array<i64: 64, 1024>}]} {
    %c0 = arith.constant 0 : index
    %0 = memref.load %arg1[%c0] : memref<2xf32, #tpu.memory_space<smem>>
    %c1 = arith.constant 1 : index
    %1 = memref.load %arg1[%c1] : memref<2xf32, #tpu.memory_space<smem>>
    %c0_0 = arith.constant 0 : index
    %c0_1 = arith.constant 0 : index
    %2 = vector.load %arg2[%c0_0, %c0_1] : memref<64x1024xf32, #tpu.memory_space<vmem>>, vector<64x1024xf32>
    %3 = math.absf %2 : vector<64x1024xf32>
    %4 = vector.broadcast %1 : f32 to vector<64x1024xf32>
    %5 = arith.mulf %3, %4 : vector<64x1024xf32>
    %6 = math.exp %5 : vector<64x1024xf32>
    %cst = arith.constant 5.000000e-01 : f32
    %7 = vector.broadcast %cst : f32 to vector<64x1024xf32>
    %8 = arith.mulf %7, %6 : vector<64x1024xf32>
    %cst_2 = arith.constant 0.000000e+00 : f32
    %9 = vector.broadcast %cst_2 : f32 to vector<64x1024xf32>
    %10 = arith.cmpf oge, %2, %9 : vector<64x1024xf32>
    %cst_3 = arith.constant 1.000000e+00 : f32
    %11 = vector.broadcast %cst_3 : f32 to vector<64x1024xf32>
    %12 = arith.subf %11, %8 : vector<64x1024xf32>
    %13 = arith.select %10, %8, %12 : vector<64x1024xi1>, vector<64x1024xf32>
    %14 = vector.broadcast %0 : f32 to vector<64x1024xf32>
    %15 = arith.mulf %14, %13 : vector<64x1024xf32>
    %c0_4 = arith.constant 0 : index
    %c0_5 = arith.constant 0 : index
    %16 = vector.load %arg3[%c0_4, %c0_5] : memref<64x1024xf32, #tpu.memory_space<vmem>>, vector<64x1024xf32>
    tpu.vector_store %arg3[%c0_4, %c0_5], %15 {strides = array<i32>} : memref<64x1024xf32, #tpu.memory_space<vmem>>, vector<64x1024xf32>,
    return
  }
  func.func @transform_0(%arg0: i32) -> i32 {
    %c0_i32 = arith.constant 0 : i32
    %c0_i32_0 = arith.constant 0 : i32
    return %c0_i32 : i32
  }
  func.func @transform_1(%arg0: i32) -> (i32, i32) {
    %c0_i32 = arith.constant 0 : i32
    %c0_i32_0 = arith.constant 0 : i32
    return %arg0, %c0_i32 : i32, i32
  }
  func.func @transform_2(%arg0: i32) -> (i32, i32) {
    %c0_i32 = arith.constant 0 : i32
    %c0_i32_0 = arith.constant 0 : i32
    return %arg0, %c0_i32 : i32, i32
  }
}

</mosaic_0001>

<llo_original>
// kernel: tpu_custom_call.1
$region0: #{tpu_custom_call.1}
  #allocation0 [shape = 'u32[]', space=smem, size = 0x4, offset = 0x4, fixed_abs, tag = 'smem constant byte address 0x4 - core index']
  #allocation1 [shape = 'u32[144,128]{1,0:T(1,128)}', space=vmem, size = 0x12000, scoped, tag = 'internal scratch']
  %s0 = inlined_call_operand.hbm [shape: f32[2], index: 0, kind: input, shape index: {}]
  %s1 = inlined_call_operand.hbm [shape: f32[64,1024], index: 1, kind: input, shape index: {}]
  %s2 = inlined_call_operand.hbm [shape: f32[64,1024], index: 2, kind: output, shape index: {}]
  %s3 = sld [smem:[#allocation0]]
  $region26: #{tpu_custom_call.1} parent=0
    _
  %s5 = ssub.s32 1, %s3
  %s6 = scalar_select 0, %s5, %s3
  $region1: #{tpu_custom_call.1} parent=0
    #allocation2 [shape = 'u8[512]{0}', space=smem, size = 0x200, scoped, tag = 'input window, operand 0, single buffered']
    #allocation3 [shape = 's32[1]{0}', space=sflag, size = 0x4, scoped, tag = 'scoped memory for tpu_custom_call.1']
    #allocation4 [shape = 's32[1]{0}', space=sflag, size = 0x4, scoped, tag = 'scoped memory for tpu_custom_call.1']
    #allocation5 [shape = 's32[1]{0}', space=sflag, size = 0x4, scoped, tag = 'scoped memory for tpu_custom_call.1']
    #allocation6 [shape = 'u8[262144]{0}', space=vmem, size = 0x40000, scoped, tag = 'input window, operand 1, single buffered']
    #allocation7 [shape = 'u8[262144]{0}', space=vmem, size = 0x40000, scoped, tag = 'output window, operand 0, single buffered']
    %7 = vsyncpa [#allocation5], 0
    %8 = vsyncpa [#allocation3], 0
    %9 = vsyncpa [#allocation4], 0
    // Predicated region
    $region2: #{tpu_custom_call.1} parent=1 // pred_check
      _
    $region3: #{tpu_custom_call.1} parent=1 // pred_check_branch
      %11 = sbr.rel (0) target = $region5
    $region4: #{tpu_custom_call.1} parent=1 // pred_region
      %s13 = ssub.s32 16, 16
      %14 = vsyncadd [#allocation5], %s13
      %17 = dma.hbm_to_smem %s0, 16, [#allocation2], [#allocation5]
    $region5: #{tpu_custom_call.1} parent=1 // pred_fallthru
      _
    // Predicated region
    $region6: #{tpu_custom_call.1} parent=1 // pred_check
      _
    $region7: #{tpu_custom_call.1} parent=1 // pred_check_branch
      %19 = sbr.rel (0) target = $region9
    $region8: #{tpu_custom_call.1} parent=1 // pred_region
      %s21 = ssub.s32 8192, 8192
      %22 = vsyncadd [#allocation3], %s21
      %s23 = sshll.u32 [#allocation6], 4
      %s24 = int_to_ptr.vmem [resolvable:$true] %s23
      %29 = dma.hbm_to_vmem [thread:$0]  %s1, 8192, %s24, [#allocation3], 1024, 1024, 64
    $region9: #{tpu_custom_call.1} parent=1 // pred_fallthru
      _
    // Predicated region
    $region10: #{tpu_custom_call.1} parent=1 // pred_check
      _
    $region11: #{tpu_custom_call.1} parent=1 // pred_check_branch
      %31 = sbr.rel (0) target = $region13
    $region12: #{tpu_custom_call.1} parent=1 // pred_region
      %32 = dma.done [#allocation5], 16
    $region13: #{tpu_custom_call.1} parent=1 // pred_fallthru
      _
    // Predicated region
    $region14: #{tpu_custom_call.1} parent=1 // pred_check
      _
    $region15: #{tpu_custom_call.1} parent=1 // pred_check_branch
      %34 = sbr.rel (0) target = $region17
    $region16: #{tpu_custom_call.1} parent=1 // pred_region
      %35 = dma.done [#allocation3], 8192
    $region17: #{tpu_custom_call.1} parent=1 // pred_fallthru
      _
    %36 = sfence
    %s37 = sld [smem:[#allocation2]]
    %s38 = sld [smem:[#allocation2 + $0x1]]
    %v39 = vld [vmem:[#allocation6] sm:$0xff]
    %v40 = vld [vmem:[#allocation6 + $0x8] sm:$0xff]
    %v41 = vld [vmem:[#allocation6 + $0x10] sm:$0xff]
    %v42 = vld [vmem:[#allocation6 + $0x18] sm:$0xff]
    %v43 = vld [vmem:[#allocation6 + $0x20] sm:$0xff]
    %v44 = vld [vmem:[#allocation6 + $0x28] sm:$0xff]
    %v45 = vld [vmem:[#allocation6 + $0x30] sm:$0xff]
    %v46 = vld [vmem:[#allocation6 + $0x38] sm:$0xff]
    %v47 = vld [vmem:[#allocation6 + $0x40] sm:$0xff]
    %v48 = vld [vmem:[#allocation6 + $0x48] sm:$0xff]
    %v49 = vld [vmem:[#allocation6 + $0x50] sm:$0xff]
    %v50 = vld [vmem:[#allocation6 + $0x58] sm:$0xff]
    %v51 = vld [vmem:[#allocation6 + $0x60] sm:$0xff]
    %v52 = vld [vmem:[#allocation6 + $0x68] sm:$0xff]
    %v53 = vld [vmem:[#allocation6 + $0x70] sm:$0xff]
    %v54 = vld [vmem:[#allocation6 + $0x78] sm:$0xff]
    %v55 = vld [vmem:[#allocation6 + $0x80] sm:$0xff]
    %v56 = vld [vmem:[#allocation6 + $0x88] sm:$0xff]
    %v57 = vld [vmem:[#allocation6 + $0x90] sm:$0xff]
    %v58 = vld [vmem:[#allocation6 + $0x98] sm:$0xff]
    %v59 = vld [vmem:[#allocation6 + $0xa0] sm:$0xff]
    %v60 = vld [vmem:[#allocation6 + $0xa8] sm:$0xff]
    %v61 = vld [vmem:[#allocation6 + $0xb0] sm:$0xff]
    %v62 = vld [vmem:[#allocation6 + $0xb8] sm:$0xff]
    %v63 = vld [vmem:[#allocation6 + $0xc0] sm:$0xff]
    %v64 = vld [vmem:[#allocation6 + $0xc8] sm:$0xff]
    %v65 = vld [vmem:[#allocation6 + $0xd0] sm:$0xff]
    %v66 = vld [vmem:[#allocation6 + $0xd8] sm:$0xff]
    %v67 = vld [vmem:[#allocation6 + $0xe0] sm:$0xff]
    %v68 = vld [vmem:[#allocation6 + $0xe8] sm:$0xff]
    %v69 = vld [vmem:[#allocation6 + $0xf0] sm:$0xff]
    %v70 = vld [vmem:[#allocation6 + $0xf8] sm:$0xff]
    %v71 = vld [vmem:[#allocation6 + $0x100] sm:$0xff]
    %v72 = vld [vmem:[#allocation6 + $0x108] sm:$0xff]
    %v73 = vld [vmem:[#allocation6 + $0x110] sm:$0xff]
    %v74 = vld [vmem:[#allocation6 + $0x118] sm:$0xff]
    %v75 = vld [vmem:[#allocation6 + $0x120] sm:$0xff]
    %v76 = vld [vmem:[#allocation6 + $0x128] sm:$0xff]
    %v77 = vld [vmem:[#allocation6 + $0x130] sm:$0xff]
    %v78 = vld [vmem:[#allocation6 + $0x138] sm:$0xff]
    %v79 = vld [vmem:[#allocation6 + $0x140] sm:$0xff]
    %v80 = vld [vmem:[#allocation6 + $0x148] sm:$0xff]
    %v81 = vld [vmem:[#allocation6 + $0x150] sm:$0xff]
    %v82 = vld [vmem:[#allocation6 + $0x158] sm:$0xff]
    %v83 = vld [vmem:[#allocation6 + $0x160] sm:$0xff]
    %v84 = vld [vmem:[#allocation6 + $0x168] sm:$0xff]
    %v85 = vld [vmem:[#allocation6 + $0x170] sm:$0xff]
    %v86 = vld [vmem:[#allocation6 + $0x178] sm:$0xff]
    %v87 = vld [vmem:[#allocation6 + $0x180] sm:$0xff]
    %v88 = vld [vmem:[#allocation6 + $0x188] sm:$0xff]
    %v89 = vld [vmem:[#allocation6 + $0x190] sm:$0xff]
    %v90 = vld [vmem:[#allocation6 + $0x198] sm:$0xff]
    %v91 = vld [vmem:[#allocation6 + $0x1a0] sm:$0xff]
    %v92 = vld [vmem:[#allocation6 + $0x1a8] sm:$0xff]
    %v93 = vld [vmem:[#allocation6 + $0x1b0] sm:$0xff]
    %v94 = vld [vmem:[#allocation6 + $0x1b8] sm:$0xff]
    %v95 = vld [vmem:[#allocation6 + $0x1c0] sm:$0xff]
    %v96 = vld [vmem:[#allocation6 + $0x1c8] sm:$0xff]
    %v97 = vld [vmem:[#allocation6 + $0x1d0] sm:$0xff]
    %v98 = vld [vmem:[#allocation6 + $0x1d8] sm:$0xff]
    %v99 = vld [vmem:[#allocation6 + $0x1e0] sm:$0xff]
    %v100 = vld [vmem:[#allocation6 + $0x1e8] sm:$0xff]
    %v101 = vld [vmem:[#allocation6 + $0x1f0] sm:$0xff]
    %v102 = vld [vmem:[#allocation6 + $0x1f8] sm:$0xff]
    %v103 = vand.u32 2147483647, %v39
    %v104 = vand.u32 2147483647, %v40
    %v105 = vand.u32 2147483647, %v41
    %v106 = vand.u32 2147483647, %v42
    %v107 = vand.u32 2147483647, %v43
    %v108 = vand.u32 2147483647, %v44
    %v109 = vand.u32 2147483647, %v45
    %v110 = vand.u32 2147483647, %v46
    %v111 = vand.u32 2147483647, %v47
    %v112 = vand.u32 2147483647, %v48
    %v113 = vand.u32 2147483647, %v49
    %v114 = vand.u32 2147483647, %v50
    %v115 = vand.u32 2147483647, %v51
    %v116 = vand.u32 2147483647, %v52
    %v117 = vand.u32 2147483647, %v53
    %v118 = vand.u32 2147483647, %v54
    %v119 = vand.u32 2147483647, %v55
    %v120 = vand.u32 2147483647, %v56
    %v121 = vand.u32 2147483647, %v57
    %v122 = vand.u32 2147483647, %v58
    %v123 = vand.u32 2147483647, %v59
    %v124 = vand.u32 2147483647, %v60
    %v125 = vand.u32 2147483647, %v61
    %v126 = vand.u32 2147483647, %v62
    %v127 = vand.u32 2147483647, %v63
    %v128 = vand.u32 2147483647, %v64
    %v129 = vand.u32 2147483647, %v65
    %v130 = vand.u32 2147483647, %v66
    %v131 = vand.u32 2147483647, %v67
    %v132 = vand.u32 2147483647, %v68
    %v133 = vand.u32 2147483647, %v69
    %v134 = vand.u32 2147483647, %v70
    %v135 = vand.u32 2147483647, %v71
    %v136 = vand.u32 2147483647, %v72
    %v137 = vand.u32 2147483647, %v73
    %v138 = vand.u32 2147483647, %v74
    %v139 = vand.u32 2147483647, %v75
    %v140 = vand.u32 2147483647, %v76
    %v141 = vand.u32 2147483647, %v77
    %v142 = vand.u32 2147483647, %v78
    %v143 = vand.u32 2147483647, %v79
    %v144 = vand.u32 2147483647, %v80
    %v145 = vand.u32 2147483647, %v81
    %v146 = vand.u32 2147483647, %v82
    %v147 = vand.u32 2147483647, %v83
    %v148 = vand.u32 2147483647, %v84
    %v149 = vand.u32 2147483647, %v85
    %v150 = vand.u32 2147483647, %v86
    %v151 = vand.u32 2147483647, %v87
    %v152 = vand.u32 2147483647, %v88
    %v153 = vand.u32 2147483647, %v89
    %v154 = vand.u32 2147483647, %v90
    %v155 = vand.u32 2147483647, %v91
    %v156 = vand.u32 2147483647, %v92
    %v157 = vand.u32 2147483647, %v93
    %v158 = vand.u32 2147483647, %v94
    %v159 = vand.u32 2147483647, %v95
    %v160 = vand.u32 2147483647, %v96
    %v161 = vand.u32 2147483647, %v97
    %v162 = vand.u32 2147483647, %v98
    %v163 = vand.u32 2147483647, %v99
    %v164 = vand.u32 2147483647, %v100
    %v165 = vand.u32 2147483647, %v101
    %v166 = vand.u32 2147483647, %v102
    %v167 = vstv %s38
    %v168 = vmul.f32 %v103, %v167
    %v169 = vmul.f32 %v104, %v167
    %v170 = vmul.f32 %v105, %v167
    %v171 = vmul.f32 %v106, %v167
    %v172 = vmul.f32 %v107, %v167
    %v173 = vmul.f32 %v108, %v167
    %v174 = vmul.f32 %v109, %v167
    %v175 = vmul.f32 %v110, %v167
    %v176 = vmul.f32 %v111, %v167
    %v177 = vmul.f32 %v112, %v167
    %v178 = vmul.f32 %v113, %v167
    %v179 = vmul.f32 %v114, %v167
    %v180 = vmul.f32 %v115, %v167
    %v181 = vmul.f32 %v116, %v167
    %v182 = vmul.f32 %v117, %v167
    %v183 = vmul.f32 %v118, %v167
    %v184 = vmul.f32 %v119, %v167
    %v185 = vmul.f32 %v120, %v167
    %v186 = vmul.f32 %v121, %v167
    %v187 = vmul.f32 %v122, %v167
    %v188 = vmul.f32 %v123, %v167
    %v189 = vmul.f32 %v124, %v167
    %v190 = vmul.f32 %v125, %v167
    %v191 = vmul.f32 %v126, %v167
    %v192 = vmul.f32 %v127, %v167
    %v193 = vmul.f32 %v128, %v167
    %v194 = vmul.f32 %v129, %v167
    %v195 = vmul.f32 %v130, %v167
    %v196 = vmul.f32 %v131, %v167
    %v197 = vmul.f32 %v132, %v167
    %v198 = vmul.f32 %v133, %v167
    %v199 = vmul.f32 %v134, %v167
    %v200 = vmul.f32 %v135, %v167
    %v201 = vmul.f32 %v136, %v167
    %v202 = vmul.f32 %v137, %v167
    %v203 = vmul.f32 %v138, %v167
    %v204 = vmul.f32 %v139, %v167
    %v205 = vmul.f32 %v140, %v167
    %v206 = vmul.f32 %v141, %v167
    %v207 = vmul.f32 %v142, %v167
    %v208 = vmul.f32 %v143, %v167
    %v209 = vmul.f32 %v144, %v167
    %v210 = vmul.f32 %v145, %v167
    %v211 = vmul.f32 %v146, %v167
    %v212 = vmul.f32 %v147, %v167
    %v213 = vmul.f32 %v148, %v167
    %v214 = vmul.f32 %v149, %v167
    %v215 = vmul.f32 %v150, %v167
    %v216 = vmul.f32 %v151, %v167
    %v217 = vmul.f32 %v152, %v167
    %v218 = vmul.f32 %v153, %v167
    %v219 = vmul.f32 %v154, %v167
    %v220 = vmul.f32 %v155, %v167
    %v221 = vmul.f32 %v156, %v167
    %v222 = vmul.f32 %v157, %v167
    %v223 = vmul.f32 %v158, %v167
    %v224 = vmul.f32 %v159, %v167
    %v225 = vmul.f32 %v160, %v167
    %v226 = vmul.f32 %v161, %v167
    %v227 = vmul.f32 %v162, %v167
    %v228 = vmul.f32 %v163, %v167
    %v229 = vmul.f32 %v164, %v167
    %v230 = vmul.f32 %v165, %v167
    %v231 = vmul.f32 %v166, %v167
    %v232 = vmul.f32 %v168, 1.442695
    %v233 = vpow.pop %v232
    %v234 = vmul.f32 %v169, 1.442695
    %v235 = vpow.pop %v234
    %v236 = vmul.f32 %v170, 1.442695
    %v237 = vpow.pop %v236
    %v238 = vmul.f32 %v171, 1.442695
    %v239 = vpow.pop %v238
    %v240 = vmul.f32 %v172, 1.442695
    %v241 = vpow.pop %v240
    %v242 = vmul.f32 %v173, 1.442695
    %v243 = vpow.pop %v242
    %v244 = vmul.f32 %v174, 1.442695
    %v245 = vpow.pop %v244
    %v246 = vmul.f32 %v175, 1.442695
    %v247 = vpow.pop %v246
    %v248 = vmul.f32 %v176, 1.442695
    %v249 = vpow.pop %v248
    %v250 = vmul.f32 %v177, 1.442695
    %v251 = vpow.pop %v250
    %v252 = vmul.f32 %v178, 1.442695
    %v253 = vpow.pop %v252
    %v254 = vmul.f32 %v179, 1.442695
    %v255 = vpow.pop %v254
    %v256 = vmul.f32 %v180, 1.442695
    %v257 = vpow.pop %v256
    %v258 = vmul.f32 %v181, 1.442695
    %v259 = vpow.pop %v258
    %v260 = vmul.f32 %v182, 1.442695
    %v261 = vpow.pop %v260
    %v262 = vmul.f32 %v183, 1.442695
    %v263 = vpow.pop %v262
    %v264 = vmul.f32 %v184, 1.442695
    %v265 = vpow.pop %v264
    %v266 = vmul.f32 %v185, 1.442695
    %v267 = vpow.pop %v266
    %v268 = vmul.f32 %v186, 1.442695
    %v269 = vpow.pop %v268
    %v270 = vmul.f32 %v187, 1.442695
    %v271 = vpow.pop %v270
    %v272 = vmul.f32 %v188, 1.442695
    %v273 = vpow.pop %v272
    %v274 = vmul.f32 %v189, 1.442695
    %v275 = vpow.pop %v274
    %v276 = vmul.f32 %v190, 1.442695
    %v277 = vpow.pop %v276
    %v278 = vmul.f32 %v191, 1.442695
    %v279 = vpow.pop %v278
    %v280 = vmul.f32 %v192, 1.442695
    %v281 = vpow.pop %v280
    %v282 = vmul.f32 %v193, 1.442695
    %v283 = vpow.pop %v282
    %v284 = vmul.f32 %v194, 1.442695
    %v285 = vpow.pop %v284
    %v286 = vmul.f32 %v195, 1.442695
    %v287 = vpow.pop %v286
    %v288 = vmul.f32 %v196, 1.442695
    %v289 = vpow.pop %v288
    %v290 = vmul.f32 %v197, 1.442695
    %v291 = vpow.pop %v290
    %v292 = vmul.f32 %v198, 1.442695
    %v293 = vpow.pop %v292
    %v294 = vmul.f32 %v199, 1.442695
    %v295 = vpow.pop %v294
    %v296 = vmul.f32 %v200, 1.442695
    %v297 = vpow.pop %v296
    %v298 = vmul.f32 %v201, 1.442695
    %v299 = vpow.pop %v298
    %v300 = vmul.f32 %v202, 1.442695
    %v301 = vpow.pop %v300
    %v302 = vmul.f32 %v203, 1.442695
    %v303 = vpow.pop %v302
    %v304 = vmul.f32 %v204, 1.442695
    %v305 = vpow.pop %v304
    %v306 = vmul.f32 %v205, 1.442695
    %v307 = vpow.pop %v306
    %v308 = vmul.f32 %v206, 1.442695
    %v309 = vpow.pop %v308
    %v310 = vmul.f32 %v207, 1.442695
    %v311 = vpow.pop %v310
    %v312 = vmul.f32 %v208, 1.442695
    %v313 = vpow.pop %v312
    %v314 = vmul.f32 %v209, 1.442695
    %v315 = vpow.pop %v314
    %v316 = vmul.f32 %v210, 1.442695
    %v317 = vpow.pop %v316
    %v318 = vmul.f32 %v211, 1.442695
    %v319 = vpow.pop %v318
    %v320 = vmul.f32 %v212, 1.442695
    %v321 = vpow.pop %v320
    %v322 = vmul.f32 %v213, 1.442695
    %v323 = vpow.pop %v322
    %v324 = vmul.f32 %v214, 1.442695
    %v325 = vpow.pop %v324
    %v326 = vmul.f32 %v215, 1.442695
    %v327 = vpow.pop %v326
    %v328 = vmul.f32 %v216, 1.442695
    %v329 = vpow.pop %v328
    %v330 = vmul.f32 %v217, 1.442695
    %v331 = vpow.pop %v330
    %v332 = vmul.f32 %v218, 1.442695
    %v333 = vpow.pop %v332
    %v334 = vmul.f32 %v219, 1.442695
    %v335 = vpow.pop %v334
    %v336 = vmul.f32 %v220, 1.442695
    %v337 = vpow.pop %v336
    %v338 = vmul.f32 %v221, 1.442695
    %v339 = vpow.pop %v338
    %v340 = vmul.f32 %v222, 1.442695
    %v341 = vpow.pop %v340
    %v342 = vmul.f32 %v223, 1.442695
    %v343 = vpow.pop %v342
    %v344 = vmul.f32 %v224, 1.442695
    %v345 = vpow.pop %v344
    %v346 = vmul.f32 %v225, 1.442695
    %v347 = vpow.pop %v346
    %v348 = vmul.f32 %v226, 1.442695
    %v349 = vpow.pop %v348
    %v350 = vmul.f32 %v227, 1.442695
    %v351 = vpow.pop %v350
    %v352 = vmul.f32 %v228, 1.442695
    %v353 = vpow.pop %v352
    %v354 = vmul.f32 %v229, 1.442695
    %v355 = vpow.pop %v354
    %v356 = vmul.f32 %v230, 1.442695
    %v357 = vpow.pop %v356
    %v358 = vmul.f32 %v231, 1.442695
    %v359 = vpow.pop %v358
    %v360 = vmul.f32 %v233, 0.5
    %v361 = vmul.f32 %v235, 0.5
    %v362 = vmul.f32 %v237, 0.5
    %v363 = vmul.f32 %v239, 0.5
    %v364 = vmul.f32 %v241, 0.5
    %v365 = vmul.f32 %v243, 0.5
    %v366 = vmul.f32 %v245, 0.5
    %v367 = vmul.f32 %v247, 0.5
    %v368 = vmul.f32 %v249, 0.5
    %v369 = vmul.f32 %v251, 0.5
    %v370 = vmul.f32 %v253, 0.5
    %v371 = vmul.f32 %v255, 0.5
    %v372 = vmul.f32 %v257, 0.5
    %v373 = vmul.f32 %v259, 0.5
    %v374 = vmul.f32 %v261, 0.5
    %v375 = vmul.f32 %v263, 0.5
    %v376 = vmul.f32 %v265, 0.5
    %v377 = vmul.f32 %v267, 0.5
    %v378 = vmul.f32 %v269, 0.5
    %v379 = vmul.f32 %v271, 0.5
    %v380 = vmul.f32 %v273, 0.5
    %v381 = vmul.f32 %v275, 0.5
    %v382 = vmul.f32 %v277, 0.5
    %v383 = vmul.f32 %v279, 0.5
    %v384 = vmul.f32 %v281, 0.5
    %v385 = vmul.f32 %v283, 0.5
    %v386 = vmul.f32 %v285, 0.5
    %v387 = vmul.f32 %v287, 0.5
    %v388 = vmul.f32 %v289, 0.5
    %v389 = vmul.f32 %v291, 0.5
    %v390 = vmul.f32 %v293, 0.5
    %v391 = vmul.f32 %v295, 0.5
    %v392 = vmul.f32 %v297, 0.5
    %v393 = vmul.f32 %v299, 0.5
    %v394 = vmul.f32 %v301, 0.5
    %v395 = vmul.f32 %v303, 0.5
    %v396 = vmul.f32 %v305, 0.5
    %v397 = vmul.f32 %v307, 0.5
    %v398 = vmul.f32 %v309, 0.5
    %v399 = vmul.f32 %v311, 0.5
    %v400 = vmul.f32 %v313, 0.5
    %v401 = vmul.f32 %v315, 0.5
    %v402 = vmul.f32 %v317, 0.5
    %v403 = vmul.f32 %v319, 0.5
    %v404 = vmul.f32 %v321, 0.5
    %v405 = vmul.f32 %v323, 0.5
    %v406 = vmul.f32 %v325, 0.5
    %v407 = vmul.f32 %v327, 0.5
    %v408 = vmul.f32 %v329, 0.5
    %v409 = vmul.f32 %v331, 0.5
    %v410 = vmul.f32 %v333, 0.5
    %v411 = vmul.f32 %v335, 0.5
    %v412 = vmul.f32 %v337, 0.5
    %v413 = vmul.f32 %v339, 0.5
    %v414 = vmul.f32 %v341, 0.5
    %v415 = vmul.f32 %v343, 0.5
    %v416 = vmul.f32 %v345, 0.5
    %v417 = vmul.f32 %v347, 0.5
    %v418 = vmul.f32 %v349, 0.5
    %v419 = vmul.f32 %v351, 0.5
    %v420 = vmul.f32 %v353, 0.5
    %v421 = vmul.f32 %v355, 0.5
    %v422 = vmul.f32 %v357, 0.5
    %v423 = vmul.f32 %v359, 0.5
    %vm424 = vcmp.ge.f32.partialorder %v39, 0.0
    %vm425 = vcmp.ge.f32.partialorder %v40, 0.0
    %vm426 = vcmp.ge.f32.partialorder %v41, 0.0
    %vm427 = vcmp.ge.f32.partialorder %v42, 0.0
    %vm428 = vcmp.ge.f32.partialorder %v43, 0.0
    %vm429 = vcmp.ge.f32.partialorder %v44, 0.0
    %vm430 = vcmp.ge.f32.partialorder %v45, 0.0
    %vm431 = vcmp.ge.f32.partialorder %v46, 0.0
    %vm432 = vcmp.ge.f32.partialorder %v47, 0.0
    %vm433 = vcmp.ge.f32.partialorder %v48, 0.0
    %vm434 = vcmp.ge.f32.partialorder %v49, 0.0
    %vm435 = vcmp.ge.f32.partialorder %v50, 0.0
    %vm436 = vcmp.ge.f32.partialorder %v51, 0.0
    %vm437 = vcmp.ge.f32.partialorder %v52, 0.0
    %vm438 = vcmp.ge.f32.partialorder %v53, 0.0
    %vm439 = vcmp.ge.f32.partialorder %v54, 0.0
    %vm440 = vcmp.ge.f32.partialorder %v55, 0.0
    %vm441 = vcmp.ge.f32.partialorder %v56, 0.0
    %vm442 = vcmp.ge.f32.partialorder %v57, 0.0
    %vm443 = vcmp.ge.f32.partialorder %v58, 0.0
    %vm444 = vcmp.ge.f32.partialorder %v59, 0.0
    %vm445 = vcmp.ge.f32.partialorder %v60, 0.0
    %vm446 = vcmp.ge.f32.partialorder %v61, 0.0
    %vm447 = vcmp.ge.f32.partialorder %v62, 0.0
    %vm448 = vcmp.ge.f32.partialorder %v63, 0.0
    %vm449 = vcmp.ge.f32.partialorder %v64, 0.0
    %vm450 = vcmp.ge.f32.partialorder %v65, 0.0
    %vm451 = vcmp.ge.f32.partialorder %v66, 0.0
    %vm452 = vcmp.ge.f32.partialorder %v67, 0.0
    %vm453 = vcmp.ge.f32.partialorder %v68, 0.0
    %vm454 = vcmp.ge.f32.partialorder %v69, 0.0
    %vm455 = vcmp.ge.f32.partialorder %v70, 0.0
    %vm456 = vcmp.ge.f32.partialorder %v71, 0.0
    %vm457 = vcmp.ge.f32.partialorder %v72, 0.0
    %vm458 = vcmp.ge.f32.partialorder %v73, 0.0
    %vm459 = vcmp.ge.f32.partialorder %v74, 0.0
    %vm460 = vcmp.ge.f32.partialorder %v75, 0.0
    %vm461 = vcmp.ge.f32.partialorder %v76, 0.0
    %vm462 = vcmp.ge.f32.partialorder %v77, 0.0
    %vm463 = vcmp.ge.f32.partialorder %v78, 0.0
    %vm464 = vcmp.ge.f32.partialorder %v79, 0.0
    %vm465 = vcmp.ge.f32.partialorder %v80, 0.0
    %vm466 = vcmp.ge.f32.partialorder %v81, 0.0
    %vm467 = vcmp.ge.f32.partialorder %v82, 0.0
    %vm468 = vcmp.ge.f32.partialorder %v83, 0.0
    %vm469 = vcmp.ge.f32.partialorder %v84, 0.0
    %vm470 = vcmp.ge.f32.partialorder %v85, 0.0
    %vm471 = vcmp.ge.f32.partialorder %v86, 0.0
    %vm472 = vcmp.ge.f32.partialorder %v87, 0.0
    %vm473 = vcmp.ge.f32.partialorder %v88, 0.0
    %vm474 = vcmp.ge.f32.partialorder %v89, 0.0
    %vm475 = vcmp.ge.f32.partialorder %v90, 0.0
    %vm476 = vcmp.ge.f32.partialorder %v91, 0.0
    %vm477 = vcmp.ge.f32.partialorder %v92, 0.0
    %vm478 = vcmp.ge.f32.partialorder %v93, 0.0
    %vm479 = vcmp.ge.f32.partialorder %v94, 0.0
    %vm480 = vcmp.ge.f32.partialorder %v95, 0.0
    %vm481 = vcmp.ge.f32.partialorder %v96, 0.0
    %vm482 = vcmp.ge.f32.partialorder %v97, 0.0
    %vm483 = vcmp.ge.f32.partialorder %v98, 0.0
    %vm484 = vcmp.ge.f32.partialorder %v99, 0.0
    %vm485 = vcmp.ge.f32.partialorder %v100, 0.0
    %vm486 = vcmp.ge.f32.partialorder %v101, 0.0
    %vm487 = vcmp.ge.f32.partialorder %v102, 0.0
    %v488 = vsub.f32 1.0, %v360
    %v489 = vsub.f32 1.0, %v361
    %v490 = vsub.f32 1.0, %v362
    %v491 = vsub.f32 1.0, %v363
    %v492 = vsub.f32 1.0, %v364
    %v493 = vsub.f32 1.0, %v365
    %v494 = vsub.f32 1.0, %v366
    %v495 = vsub.f32 1.0, %v367
    %v496 = vsub.f32 1.0, %v368
    %v497 = vsub.f32 1.0, %v369
    %v498 = vsub.f32 1.0, %v370
    %v499 = vsub.f32 1.0, %v371
    %v500 = vsub.f32 1.0, %v372
    %v501 = vsub.f32 1.0, %v373
    %v502 = vsub.f32 1.0, %v374
    %v503 = vsub.f32 1.0, %v375
    %v504 = vsub.f32 1.0, %v376
    %v505 = vsub.f32 1.0, %v377
    %v506 = vsub.f32 1.0, %v378
    %v507 = vsub.f32 1.0, %v379
    %v508 = vsub.f32 1.0, %v380
    %v509 = vsub.f32 1.0, %v381
    %v510 = vsub.f32 1.0, %v382
    %v511 = vsub.f32 1.0, %v383
    %v512 = vsub.f32 1.0, %v384
    %v513 = vsub.f32 1.0, %v385
    %v514 = vsub.f32 1.0, %v386
    %v515 = vsub.f32 1.0, %v387
    %v516 = vsub.f32 1.0, %v388
    %v517 = vsub.f32 1.0, %v389
    %v518 = vsub.f32 1.0, %v390
    %v519 = vsub.f32 1.0, %v391
    %v520 = vsub.f32 1.0, %v392
    %v521 = vsub.f32 1.0, %v393
    %v522 = vsub.f32 1.0, %v394
    %v523 = vsub.f32 1.0, %v395
    %v524 = vsub.f32 1.0, %v396
    %v525 = vsub.f32 1.0, %v397
    %v526 = vsub.f32 1.0, %v398
    %v527 = vsub.f32 1.0, %v399
    %v528 = vsub.f32 1.0, %v400
    %v529 = vsub.f32 1.0, %v401
    %v530 = vsub.f32 1.0, %v402
    %v531 = vsub.f32 1.0, %v403
    %v532 = vsub.f32 1.0, %v404
    %v533 = vsub.f32 1.0, %v405
    %v534 = vsub.f32 1.0, %v406
    %v535 = vsub.f32 1.0, %v407
    %v536 = vsub.f32 1.0, %v408
    %v537 = vsub.f32 1.0, %v409
    %v538 = vsub.f32 1.0, %v410
    %v539 = vsub.f32 1.0, %v411
    %v540 = vsub.f32 1.0, %v412
    %v541 = vsub.f32 1.0, %v413
    %v542 = vsub.f32 1.0, %v414
    %v543 = vsub.f32 1.0, %v415
    %v544 = vsub.f32 1.0, %v416
    %v545 = vsub.f32 1.0, %v417
    %v546 = vsub.f32 1.0, %v418
    %v547 = vsub.f32 1.0, %v419
    %v548 = vsub.f32 1.0, %v420
    %v549 = vsub.f32 1.0, %v421
    %v550 = vsub.f32 1.0, %v422
    %v551 = vsub.f32 1.0, %v423
    %v552 = vsel %vm424, %v360, %v488
    %v553 = vsel %vm425, %v361, %v489
    %v554 = vsel %vm426, %v362, %v490
    %v555 = vsel %vm427, %v363, %v491
    %v556 = vsel %vm428, %v364, %v492
    %v557 = vsel %vm429, %v365, %v493
    %v558 = vsel %vm430, %v366, %v494
    %v559 = vsel %vm431, %v367, %v495
    %v560 = vsel %vm432, %v368, %v496
    %v561 = vsel %vm433, %v369, %v497
    %v562 = vsel %vm434, %v370, %v498
    %v563 = vsel %vm435, %v371, %v499
    %v564 = vsel %vm436, %v372, %v500
    %v565 = vsel %vm437, %v373, %v501
    %v566 = vsel %vm438, %v374, %v502
    %v567 = vsel %vm439, %v375, %v503
    %v568 = vsel %vm440, %v376, %v504
    %v569 = vsel %vm441, %v377, %v505
    %v570 = vsel %vm442, %v378, %v506
    %v571 = vsel %vm443, %v379, %v507
    %v572 = vsel %vm444, %v380, %v508
    %v573 = vsel %vm445, %v381, %v509
    %v574 = vsel %vm446, %v382, %v510
    %v575 = vsel %vm447, %v383, %v511
    %v576 = vsel %vm448, %v384, %v512
    %v577 = vsel %vm449, %v385, %v513
    %v578 = vsel %vm450, %v386, %v514
    %v579 = vsel %vm451, %v387, %v515
    %v580 = vsel %vm452, %v388, %v516
    %v581 = vsel %vm453, %v389, %v517
    %v582 = vsel %vm454, %v390, %v518
    %v583 = vsel %vm455, %v391, %v519
    %v584 = vsel %vm456, %v392, %v520
    %v585 = vsel %vm457, %v393, %v521
    %v586 = vsel %vm458, %v394, %v522
    %v587 = vsel %vm459, %v395, %v523
    %v588 = vsel %vm460, %v396, %v524
    %v589 = vsel %vm461, %v397, %v525
    %v590 = vsel %vm462, %v398, %v526
    %v591 = vsel %vm463, %v399, %v527
    %v592 = vsel %vm464, %v400, %v528
    %v593 = vsel %vm465, %v401, %v529
    %v594 = vsel %vm466, %v402, %v530
    %v595 = vsel %vm467, %v403, %v531
    %v596 = vsel %vm468, %v404, %v532
    %v597 = vsel %vm469, %v405, %v533
    %v598 = vsel %vm470, %v406, %v534
    %v599 = vsel %vm471, %v407, %v535
    %v600 = vsel %vm472, %v408, %v536
    %v601 = vsel %vm473, %v409, %v537
    %v602 = vsel %vm474, %v410, %v538
    %v603 = vsel %vm475, %v411, %v539
    %v604 = vsel %vm476, %v412, %v540
    %v605 = vsel %vm477, %v413, %v541
    %v606 = vsel %vm478, %v414, %v542
    %v607 = vsel %vm479, %v415, %v543
    %v608 = vsel %vm480, %v416, %v544
    %v609 = vsel %vm481, %v417, %v545
    %v610 = vsel %vm482, %v418, %v546
    %v611 = vsel %vm483, %v419, %v547
    %v612 = vsel %vm484, %v420, %v548
    %v613 = vsel %vm485, %v421, %v549
    %v614 = vsel %vm486, %v422, %v550
    %v615 = vsel %vm487, %v423, %v551
    %v616 = vstv %s37
    %v617 = vmul.f32 %v616, %v552
    %v618 = vmul.f32 %v616, %v553
    %v619 = vmul.f32 %v616, %v554
    %v620 = vmul.f32 %v616, %v555
    %v621 = vmul.f32 %v616, %v556
    %v622 = vmul.f32 %v616, %v557
    %v623 = vmul.f32 %v616, %v558
    %v624 = vmul.f32 %v616, %v559
    %v625 = vmul.f32 %v616, %v560
    %v626 = vmul.f32 %v616, %v561
    %v627 = vmul.f32 %v616, %v562
    %v628 = vmul.f32 %v616, %v563
    %v629 = vmul.f32 %v616, %v564
    %v630 = vmul.f32 %v616, %v565
    %v631 = vmul.f32 %v616, %v566
    %v632 = vmul.f32 %v616, %v567
    %v633 = vmul.f32 %v616, %v568
    %v634 = vmul.f32 %v616, %v569
    %v635 = vmul.f32 %v616, %v570
    %v636 = vmul.f32 %v616, %v571
    %v637 = vmul.f32 %v616, %v572
    %v638 = vmul.f32 %v616, %v573
    %v639 = vmul.f32 %v616, %v574
    %v640 = vmul.f32 %v616, %v575
    %v641 = vmul.f32 %v616, %v576
    %v642 = vmul.f32 %v616, %v577
    %v643 = vmul.f32 %v616, %v578
    %v644 = vmul.f32 %v616, %v579
    %v645 = vmul.f32 %v616, %v580
    %v646 = vmul.f32 %v616, %v581
    %v647 = vmul.f32 %v616, %v582
    %v648 = vmul.f32 %v616, %v583
    %v649 = vmul.f32 %v616, %v584
    %v650 = vmul.f32 %v616, %v585
    %v651 = vmul.f32 %v616, %v586
    %v652 = vmul.f32 %v616, %v587
    %v653 = vmul.f32 %v616, %v588
    %v654 = vmul.f32 %v616, %v589
    %v655 = vmul.f32 %v616, %v590
    %v656 = vmul.f32 %v616, %v591
    %v657 = vmul.f32 %v616, %v592
    %v658 = vmul.f32 %v616, %v593
    %v659 = vmul.f32 %v616, %v594
    %v660 = vmul.f32 %v616, %v595
    %v661 = vmul.f32 %v616, %v596
    %v662 = vmul.f32 %v616, %v597
    %v663 = vmul.f32 %v616, %v598
    %v664 = vmul.f32 %v616, %v599
    %v665 = vmul.f32 %v616, %v600
    %v666 = vmul.f32 %v616, %v601
    %v667 = vmul.f32 %v616, %v602
    %v668 = vmul.f32 %v616, %v603
    %v669 = vmul.f32 %v616, %v604
    %v670 = vmul.f32 %v616, %v605
    %v671 = vmul.f32 %v616, %v606
    %v672 = vmul.f32 %v616, %v607
    %v673 = vmul.f32 %v616, %v608
    %v674 = vmul.f32 %v616, %v609
    %v675 = vmul.f32 %v616, %v610
    %v676 = vmul.f32 %v616, %v611
    %v677 = vmul.f32 %v616, %v612
    %v678 = vmul.f32 %v616, %v613
    %v679 = vmul.f32 %v616, %v614
    %v680 = vmul.f32 %v616, %v615
    %681 = vst [vmem:[#allocation7] sm:$0xff] %v617
    %682 = vst [vmem:[#allocation7 + $0x8] sm:$0xff] %v618
    %683 = vst [vmem:[#allocation7 + $0x10] sm:$0xff] %v619
    %684 = vst [vmem:[#allocation7 + $0x18] sm:$0xff] %v620
    %685 = vst [vmem:[#allocation7 + $0x20] sm:$0xff] %v621
    %686 = vst [vmem:[#allocation7 + $0x28] sm:$0xff] %v622
    %687 = vst [vmem:[#allocation7 + $0x30] sm:$0xff] %v623
    %688 = vst [vmem:[#allocation7 + $0x38] sm:$0xff] %v624
    %689 = vst [vmem:[#allocation7 + $0x40] sm:$0xff] %v625
    %690 = vst [vmem:[#allocation7 + $0x48] sm:$0xff] %v626
    %691 = vst [vmem:[#allocation7 + $0x50] sm:$0xff] %v627
    %692 = vst [vmem:[#allocation7 + $0x58] sm:$0xff] %v628
    %693 = vst [vmem:[#allocation7 + $0x60] sm:$0xff] %v629
    %694 = vst [vmem:[#allocation7 + $0x68] sm:$0xff] %v630
    %695 = vst [vmem:[#allocation7 + $0x70] sm:$0xff] %v631
    %696 = vst [vmem:[#allocation7 + $0x78] sm:$0xff] %v632
    %697 = vst [vmem:[#allocation7 + $0x80] sm:$0xff] %v633
    %698 = vst [vmem:[#allocation7 + $0x88] sm:$0xff] %v634
    %699 = vst [vmem:[#allocation7 + $0x90] sm:$0xff] %v635
    %700 = vst [vmem:[#allocation7 + $0x98] sm:$0xff] %v636
    %701 = vst [vmem:[#allocation7 + $0xa0] sm:$0xff] %v637
    %702 = vst [vmem:[#allocation7 + $0xa8] sm:$0xff] %v638
    %703 = vst [vmem:[#allocation7 + $0xb0] sm:$0xff] %v639
    %704 = vst [vmem:[#allocation7 + $0xb8] sm:$0xff] %v640
    %705 = vst [vmem:[#allocation7 + $0xc0] sm:$0xff] %v641
    %706 = vst [vmem:[#allocation7 + $0xc8] sm:$0xff] %v642
    %707 = vst [vmem:[#allocation7 + $0xd0] sm:$0xff] %v643
    %708 = vst [vmem:[#allocation7 + $0xd8] sm:$0xff] %v644
    %709 = vst [vmem:[#allocation7 + $0xe0] sm:$0xff] %v645
    %710 = vst [vmem:[#allocation7 + $0xe8] sm:$0xff] %v646
    %711 = vst [vmem:[#allocation7 + $0xf0] sm:$0xff] %v647
    %712 = vst [vmem:[#allocation7 + $0xf8] sm:$0xff] %v648
    %713 = vst [vmem:[#allocation7 + $0x100] sm:$0xff] %v649
    %714 = vst [vmem:[#allocation7 + $0x108] sm:$0xff] %v650
    %715 = vst [vmem:[#allocation7 + $0x110] sm:$0xff] %v651
    %716 = vst [vmem:[#allocation7 + $0x118] sm:$0xff] %v652
    %717 = vst [vmem:[#allocation7 + $0x120] sm:$0xff] %v653
    %718 = vst [vmem:[#allocation7 + $0x128] sm:$0xff] %v654
    %719 = vst [vmem:[#allocation7 + $0x130] sm:$0xff] %v655
    %720 = vst [vmem:[#allocation7 + $0x138] sm:$0xff] %v656
    %721 = vst [vmem:[#allocation7 + $0x140] sm:$0xff] %v657
    %722 = vst [vmem:[#allocation7 + $0x148] sm:$0xff] %v658
    %723 = vst [vmem:[#allocation7 + $0x150] sm:$0xff] %v659
    %724 = vst [vmem:[#allocation7 + $0x158] sm:$0xff] %v660
    %725 = vst [vmem:[#allocation7 + $0x160] sm:$0xff] %v661
    %726 = vst [vmem:[#allocation7 + $0x168] sm:$0xff] %v662
    %727 = vst [vmem:[#allocation7 + $0x170] sm:$0xff] %v663
    %728 = vst [vmem:[#allocation7 + $0x178] sm:$0xff] %v664
    %729 = vst [vmem:[#allocation7 + $0x180] sm:$0xff] %v665
    %730 = vst [vmem:[#allocation7 + $0x188] sm:$0xff] %v666
    %731 = vst [vmem:[#allocation7 + $0x190] sm:$0xff] %v667
    %732 = vst [vmem:[#allocation7 + $0x198] sm:$0xff] %v668
    %733 = vst [vmem:[#allocation7 + $0x1a0] sm:$0xff] %v669
    %734 = vst [vmem:[#allocation7 + $0x1a8] sm:$0xff] %v670
    %735 = vst [vmem:[#allocation7 + $0x1b0] sm:$0xff] %v671
    %736 = vst [vmem:[#allocation7 + $0x1b8] sm:$0xff] %v672
    %737 = vst [vmem:[#allocation7 + $0x1c0] sm:$0xff] %v673
    %738 = vst [vmem:[#allocation7 + $0x1c8] sm:$0xff] %v674
    %739 = vst [vmem:[#allocation7 + $0x1d0] sm:$0xff] %v675
    %740 = vst [vmem:[#allocation7 + $0x1d8] sm:$0xff] %v676
    %741 = vst [vmem:[#allocation7 + $0x1e0] sm:$0xff] %v677
    %742 = vst [vmem:[#allocation7 + $0x1e8] sm:$0xff] %v678
    %743 = vst [vmem:[#allocation7 + $0x1f0] sm:$0xff] %v679
    %744 = vst [vmem:[#allocation7 + $0x1f8] sm:$0xff] %v680
    // Predicated region
    $region18: #{tpu_custom_call.1} parent=1 // pred_check
      _
    $region19: #{tpu_custom_call.1} parent=1 // pred_check_branch
      %746 = sbr.rel (0) target = $region21
    $region20: #{tpu_custom_call.1} parent=1 // pred_region
      %s748 = ssub.s32 8192, 8192
      %749 = vsyncadd [#allocation4], %s748
      %s750 = sshll.u32 [#allocation7], 4
      %s751 = int_to_ptr.vmem [resolvable:$true] %s750
      %756 = dma.vmem_to_hbm [thread:$0]  %s751, 8192, %s2, [#allocation4], 1024, 1024, 64
    $region21: #{tpu_custom_call.1} parent=1 // pred_fallthru
      _
    // Predicated region
    $region22: #{tpu_custom_call.1} parent=1 // pred_check
      _
    $region23: #{tpu_custom_call.1} parent=1 // pred_check_branch
      %758 = sbr.rel (0) target = $region25
    $region24: #{tpu_custom_call.1} parent=1 // pred_region
      %759 = dma.done [#allocation4], 8192
    $region25: #{tpu_custom_call.1} parent=1 // pred_fallthru
      _
    %760 = vsyncpa [#allocation3], 1
    %761 = vsyncpa [#allocation4], 1
    %762 = vsyncpa [#allocation5], 1

</llo_original>
